<compile_context>
chip_gen: v7x
topology: tpu7x:2x2x1
jax: 0.10.0
libtpu: 0.0.40
codegen_flags: <defaults>
</compile_context>

<pallas_src>
import functools

import jax
import jax.numpy as jnp
from jax import lax
from jax.experimental import pallas as pl
from jax.experimental.pallas import tpu as pltpu


_DEFAULT_BLOCK_BUDGET = 2 * 1024 * 1024  # bytes per pipelined input block (double-buffered)


def _make_sobel_kernel(W: int, TL: int, HALO: int):
    """Kernel over one (NB, C, TL) flattened tile; sbuf carries a 2-row halo."""

    def kernel(x_ref, o_ref, sbuf_ref):
        # sbuf[:, j] == channel-summed input at flattened position i*TL + j - HALO.
        # 1) Carry the previous tile's last 2 rows to the front (garbage on the first
        #    tile of each image — those outputs are cropped in the wrapper).
        sbuf_ref[:, 0:HALO] = sbuf_ref[:, TL:TL + HALO]

        # 2) Channel reduction (kernel replicated over C => reduce channels first).
        x = x_ref[...]
        s = jnp.sum(x, axis=1)
        if s.dtype != jnp.float32:
            s = s.astype(jnp.float32)
        sbuf_ref[:, HALO:HALO + TL] = s

        # 3) Separable Sobel on the flattened row-major axis.
        #    h[j] = x[r, c+2] - x[r, c]   (horizontal difference)
        #    v[j] = x[r+2, c] - x[r, c]   (vertical difference)
        wide = TL + HALO
        h = sbuf_ref[:, 2:2 + wide] - sbuf_ref[:, 0:wide]            # (NB, TL+2W)
        v = sbuf_ref[:, HALO:HALO + TL + 2] - sbuf_ref[:, 0:TL + 2]  # (NB, TL+2)

        # Gx = h(r) + 2*h(r+1) + 2*h(r+2);  Gy = v(c) + 2*v(c+1) + v(c+2)
        gx = h[:, 0:TL] + 2.0 * h[:, W:W + TL] + h[:, HALO:HALO + TL]
        gy = v[:, 0:TL] + 2.0 * v[:, 1:1 + TL] + v[:, 2:2 + TL]

        # Lane-dense store; cross-row/halo wrap garbage lands only in positions that
        # the wrapper crops away.
        o_ref[...] = gx * gx + gy * gy

    return kernel


def _largest_divisor(n, ok):
    best = None
    for d in range(1, n + 1):
        if n % d == 0 and ok(d):
            best = d
    return best


@functools.partial(jax.jit, static_argnames=("block_budget_bytes",))
def sobel_pallas(x, *, block_budget_bytes=None):
    """x: (N, C, H, W) float32 -> (N, 1, H-2, W-2) float32."""
    N, C, H, W = x.shape
    if H < 3 or W < 3:
        raise ValueError("Sobel requires H >= 3 and W >= 3 (valid 3x3 conv).")
    budget = _DEFAULT_BLOCK_BUDGET if block_budget_bytes is None else block_budget_bytes
    itemsize = jnp.dtype(x.dtype).itemsize

    Ho, Wo = H - 2, W - 2
    L = H * W
    HALO = 2 * W

    # --- tile selection -----------------------------------------------------
    img_bytes = C * L * itemsize
    # Batch-block small images (NB == N or a multiple of 8 keeps blocks layout-friendly).
    NB = _largest_divisor(N, lambda d: d * img_bytes <= budget and (d == N or d % 8 == 0))
    if NB is not None:
        TH = H                                   # whole image fits the block budget
    else:
        NB = 1
        # Tile H (flattened: chunks of TH*W lanes) with the 2-row halo carry.
        TH = _largest_divisor(
            H,
            lambda th: th >= 2 and C * th * W * itemsize <= budget and (th * W) % 128 == 0,
        )
        if TH is None:
            # TODO(synk): no lane-aligned H-tile divides H; fall back to whole-image
            # blocks (may exceed the VMEM block budget for extreme shapes).
            TH = H
    TL = TH * W
    num_b = N // NB
    num_l = L // TL

    # Free row-major reshape: (H, W) -> L on the lane axis.
    x_flat = x.reshape(N, C, L)
    kernel = _make_sobel_kernel(W, TL, HALO)

    out_alloc = pl.pallas_call(
        kernel,
        out_shape=jax.ShapeDtypeStruct((N, L), jnp.float32),
        grid_spec=pltpu.PrefetchScalarGridSpec(
            num_scalar_prefetch=0,
            grid=(num_b, num_l),
            in_specs=[pl.BlockSpec((NB, C, TL), lambda b, i: (b, 0, i))],
            out_specs=pl.BlockSpec((NB, TL), lambda b, i: (b, i)),
            scratch_shapes=[pltpu.VMEM((NB, TL + HALO + 2), jnp.float32)],
        ),
        compiler_params=pltpu.CompilerParams(
            dimension_semantics=("parallel", "arbitrary"),
            vmem_limit_bytes=32 * 1024 * 1024,
        ),
    )(x_flat)

    # Output slab is shifted by +2 rows (halo-carry convention); crop the 2 junk
    # leading rows and the 2 wrap-around columns, then add the channel dim.
    g = out_alloc.reshape(N, H, W)[:, 2:, :Wo]
    return g[:, None, :, :]


def sobel_reference(x):
    """Pure-JAX reference matching the PyTorch module (matching-channels branch)."""
    C = x.shape[1]
    kx = jnp.array([[-1., 0., 1.], [-2., 0., 2.], [-1., 0., 1.]], jnp.float32)
    ky = jnp.array([[-1., -2., -1.], [0., 0., 0.], [1., 2., 1.]], jnp.float32)
    Kx = jnp.broadcast_to(kx, (1, C, 3, 3))
    Ky = jnp.broadcast_to(ky, (1, C, 3, 3))
    dn = lax.conv_dimension_numbers(x.shape, Kx.shape, ("NCHW", "OIHW", "NCHW"))
    gx = lax.conv_general_dilated(x, Kx, (1, 1), "VALID", dimension_numbers=dn)
    gy = lax.conv_general_dilated(x, Ky, (1, 1), "VALID", dimension_numbers=dn)
    return gx ** 2 + gy ** 2


if __name__ == "__main__":
    key = jax.random.PRNGKey(0)

    # Test 1: the module's nominal small shape (single-tile, batch-blocked path).
    N, C, H, W = 2, 4, 16, 16
    x1 = jax.random.normal(key, (N, C, H, W), dtype=jnp.float32)
    out1 = sobel_pallas(x1)
    jax.block_until_ready(out1)
    ref1 = sobel_reference(x1)
    assert out1.shape == (N, 1, H - 2, W - 2), out1.shape
    assert jnp.allclose(out1, ref1, atol=1e-4, rtol=1e-4), \
        float(jnp.max(jnp.abs(out1 - ref1)))

    # Test 2: force the spatially tiled (halo-carry) path with a tiny block budget.
    x2 = jax.random.normal(jax.random.fold_in(key, 1), (1, 4, 64, 128), dtype=jnp.float32)
    out2 = sobel_pallas(x2, block_budget_bytes=32 * 1024)
    jax.block_until_ready(out2)
    ref2 = sobel_reference(x2)
    assert out2.shape == (1, 1, 62, 126), out2.shape
    assert jnp.allclose(out2, ref2, atol=1e-4, rtol=1e-4), \
        float(jnp.max(jnp.abs(out2 - ref2)))

    print("KERNEL_OK")
</pallas_src>

<mosaic_0001>
module attributes {stable_mosaic.version = 11 : i64} {
  func.func @kernel(%arg0: i32, %arg1: i32, %arg2: memref<2x4x256xf32, #tpu.memory_space<vmem>>, %arg3: memref<2x256xf32, #tpu.memory_space<vmem>>, %arg4: memref<2x290xf32, #tpu.memory_space<vmem>>) attributes {dimension_semantics = [#tpu.dimension_semantics<parallel>, #tpu.dimension_semantics<arbitrary>], iteration_bounds = array<i64: 1, 1>, scalar_prefetch = 0 : i64, scratch_operands = 1 : i64, tpu.core_type = #tpu.core_type<tc>, window_params = [{transform_indices = @transform_0, window_bounds = array<i64: 2, 4, 256>}, {transform_indices = @transform_1, window_bounds = array<i64: 2, 256>}]} {
    %c0 = arith.constant 0 : index
    %c256 = arith.constant 256 : index
    %0 = vector.load %arg4[%c0, %c256] : memref<2x290xf32, #tpu.memory_space<vmem>>, vector<2x32xf32>
    %c0_0 = arith.constant 0 : index
    %c0_1 = arith.constant 0 : index
    %1 = vector.load %arg4[%c0_0, %c0_1] : memref<2x290xf32, #tpu.memory_space<vmem>>, vector<2x32xf32>
    tpu.vector_store %arg4[%c0_0, %c0_1], %0 {strides = array<i32>} : memref<2x290xf32, #tpu.memory_space<vmem>>, vector<2x32xf32>,
    %c0_2 = arith.constant 0 : index
    %c0_3 = arith.constant 0 : index
    %c0_4 = arith.constant 0 : index
    %2 = vector.load %arg2[%c0_2, %c0_3, %c0_4] : memref<2x4x256xf32, #tpu.memory_space<vmem>>, vector<2x4x256xf32>
    %cst = arith.constant dense<0.000000e+00> : vector<2x256xf32>
    %3 = vector.multi_reduction <add>, %2, %cst [1] : vector<2x4x256xf32> to vector<2x256xf32>
    %c0_5 = arith.constant 0 : index
    %c32 = arith.constant 32 : index
    %4 = vector.load %arg4[%c0_5, %c32] : memref<2x290xf32, #tpu.memory_space<vmem>>, vector<2x256xf32>
    tpu.vector_store %arg4[%c0_5, %c32], %3 {strides = array<i32>} : memref<2x290xf32, #tpu.memory_space<vmem>>, vector<2x256xf32>,
    %c0_6 = arith.constant 0 : index
    %c2 = arith.constant 2 : index
    %5 = vector.load %arg4[%c0_6, %c2] : memref<2x290xf32, #tpu.memory_space<vmem>>, vector<2x288xf32>
    %c0_7 = arith.constant 0 : index
    %c0_8 = arith.constant 0 : index
    %6 = vector.load %arg4[%c0_7, %c0_8] : memref<2x290xf32, #tpu.memory_space<vmem>>, vector<2x288xf32>
    %7 = arith.subf %5, %6 : vector<2x288xf32>
    %c0_9 = arith.constant 0 : index
    %c32_10 = arith.constant 32 : index
    %8 = vector.load %arg4[%c0_9, %c32_10] : memref<2x290xf32, #tpu.memory_space<vmem>>, vector<2x258xf32>
    %c0_11 = arith.constant 0 : index
    %c0_12 = arith.constant 0 : index
    %9 = vector.load %arg4[%c0_11, %c0_12] : memref<2x290xf32, #tpu.memory_space<vmem>>, vector<2x258xf32>
    %10 = arith.subf %8, %9 : vector<2x258xf32>
    %11 = vector.extract_strided_slice %7 {offsets = [0, 0], sizes = [2, 256], strides = [1, 1]} : vector<2x288xf32> to vector<2x256xf32>
    %12 = vector.extract_strided_slice %7 {offsets = [0, 16], sizes = [2, 256], strides = [1, 1]} : vector<2x288xf32> to vector<2x256xf32>
    %cst_13 = arith.constant 2.000000e+00 : f32
    %13 = vector.broadcast %cst_13 : f32 to vector<2x256xf32>
    %14 = arith.mulf %13, %12 : vector<2x256xf32>
    %15 = arith.addf %11, %14 : vector<2x256xf32>
    %16 = vector.extract_strided_slice %7 {offsets = [0, 32], sizes = [2, 256], strides = [1, 1]} : vector<2x288xf32> to vector<2x256xf32>
    %17 = arith.addf %15, %16 : vector<2x256xf32>
    %18 = vector.extract_strided_slice %10 {offsets = [0, 0], sizes = [2, 256], strides = [1, 1]} : vector<2x258xf32> to vector<2x256xf32>
    %19 = vector.extract_strided_slice %10 {offsets = [0, 1], sizes = [2, 256], strides = [1, 1]} : vector<2x258xf32> to vector<2x256xf32>
    %cst_14 = arith.constant 2.000000e+00 : f32
    %20 = vector.broadcast %cst_14 : f32 to vector<2x256xf32>
    %21 = arith.mulf %20, %19 : vector<2x256xf32>
    %22 = arith.addf %18, %21 : vector<2x256xf32>
    %23 = vector.extract_strided_slice %10 {offsets = [0, 2], sizes = [2, 256], strides = [1, 1]} : vector<2x258xf32> to vector<2x256xf32>
    %24 = arith.addf %22, %23 : vector<2x256xf32>
    %25 = arith.mulf %17, %17 : vector<2x256xf32>
    %26 = arith.mulf %24, %24 : vector<2x256xf32>
    %27 = arith.addf %25, %26 : vector<2x256xf32>
    %c0_15 = arith.constant 0 : index
    %c0_16 = arith.constant 0 : index
    %28 = vector.load %arg3[%c0_15, %c0_16] : memref<2x256xf32, #tpu.memory_space<vmem>>, vector<2x256xf32>
    tpu.vector_store %arg3[%c0_15, %c0_16], %27 {strides = array<i32>} : memref<2x256xf32, #tpu.memory_space<vmem>>, vector<2x256xf32>,
    return
  }
  func.func @transform_0(%arg0: i32, %arg1: i32) -> (i32, i32, i32) {
    %c0_i32 = arith.constant 0 : i32
    %c0_i32_0 = arith.constant 0 : i32
    return %arg0, %c0_i32, %arg1 : i32, i32, i32
  }
  func.func @transform_1(%arg0: i32, %arg1: i32) -> (i32, i32) {
    %c0_i32 = arith.constant 0 : i32
    return %arg0, %arg1 : i32, i32
  }
}

</mosaic_0001>

<llo_original>
// kernel: sobel_pallas.1
$region0: #{sobel_pallas.1}
  #allocation0 [shape = 'u32[]', space=smem, size = 0x4, offset = 0x4, fixed_abs, tag = 'smem constant byte address 0x4 - core index']
  #allocation1 [shape = 'u32[144,128]{1,0:T(1,128)}', space=vmem, size = 0x12000, scoped, tag = 'internal scratch']
  #allocation2 [shape = 'f32[2,290]{1,0:T(2,128)}', space=vmem, size = 0xc00, scoped, tag = 'scratch operand']
  %s0 = inlined_call_operand.vmem [shape: f32[2,4,256], index: 0, kind: input, shape index: {}]
  %s1 = inlined_call_operand.vmem [shape: f32[2,256], index: 1, kind: output, shape index: {}]
  %s2 = sld [smem:[#allocation0]]
  $region14: #{sobel_pallas.1} parent=0
    _
  %s4 = ssub.s32 1, %s2
  %s5 = scalar_select 0, %s4, %s2
  // Predicated region
  $region2: #{sobel_pallas.1} parent=0 // pred_check
    _
  $region3: #{sobel_pallas.1} parent=0 // pred_check_branch
    %7 = sbr.rel (0) target = $region5
  $region4: #{sobel_pallas.1} parent=0 // pred_region
    _
  $region5: #{sobel_pallas.1} parent=0 // pred_fallthru
    _
  %v8 = vld [vmem:[#allocation2 + $0x4] sm:$0x3]
  %vm9 = vcmask 254976
  %10 = vst.msk [vmem:[#allocation2] sm:$0x3] %vm9, %v8
  %v11 = vld [vmem:[%s0] sm:$0xff]
  %v12 = vld [vmem:[%s0 + $0x8] sm:$0xff]
  %v15 = vcombine.high %v11, %v11
  %v16 = vcombine.high %v12, %v12
  %vm19 = vcmask 1043456
  %v20 = vsel %vm19, %v11, 0.0
  %v21 = vrot.slane %v20, 4
  %v22 = vadd.f32 %v20, %v21
  %v23 = vrot.slane %v22, 2
  %v24 = vadd.f32 %v22, %v23
  %v25 = vrot.slane %v24, 1
  %v26 = vadd.f32 %v24, %v25
  %v27 = vsel %vm19, %v15, 0.0
  %v28 = vrot.slane %v27, 4
  %v29 = vadd.f32 %v27, %v28
  %v30 = vrot.slane %v29, 2
  %v31 = vadd.f32 %v29, %v30
  %v32 = vrot.slane %v31, 1
  %v33 = vadd.f32 %v31, %v32
  %v34 = vsel %vm19, %v12, 0.0
  %v35 = vrot.slane %v34, 4
  %v36 = vadd.f32 %v34, %v35
  %v37 = vrot.slane %v36, 2
  %v38 = vadd.f32 %v36, %v37
  %v39 = vrot.slane %v38, 1
  %v40 = vadd.f32 %v38, %v39
  %v41 = vsel %vm19, %v16, 0.0
  %v42 = vrot.slane %v41, 4
  %v43 = vadd.f32 %v41, %v42
  %v44 = vrot.slane %v43, 2
  %v45 = vadd.f32 %v43, %v44
  %v46 = vrot.slane %v45, 1
  %v47 = vadd.f32 %v45, %v46
  %v52 = vcombine.low %v26, %v33
  %v54 = vunpack.c.l.s4 1983009808
  %v55 = vunpack.c.0.s8 %v54
  %v56 = vlaneseq
  %v57 = vshrl.u32 %v56, 7
  %v58 = vsub.s32 %v55, %v57
  %v59 = vrot.slane %v52, %v58
  %v60 = vcombine.low %v40, %v47
  %v62 = vunpack.c.l.s4 1983009808
  %v63 = vunpack.c.0.s8 %v62
  %v64 = vlaneseq
  %v65 = vshrl.u32 %v64, 7
  %v66 = vsub.s32 %v63, %v65
  %v67 = vrot.slane %v60, %v66
  %vm68 = vcmask 1044484
  %v69 = vsel %vm68, %v59, %v59
  %vm70 = vcmask 1046534
  %v71 = vsel %vm70, %v59, %v69
  %v72 = vrot.slane %v67, 7
  %vm73 = vcmask 1041409
  %v74 = vsel %vm73, %v72, %v71
  %vm75 = vcmask 1043459
  %v76 = vsel %vm75, %v72, %v74
  %vm77 = vcmask 1045509
  %v78 = vsel %vm77, %v72, %v76
  %vm79 = vcmask 1047559
  %v80 = vsel %vm79, %v72, %v78
  %81 = vrot.lane.b32.xlu0 %v80, 32
  %v82 = vpop.permute.xlu0 %81
  %v83 = vrot.slane %v82, 6
  %vm84 = vcmask 261120
  %v85 = vsel %vm84, %v83, %v82
  %vm87 = vcmask 1041664
  %vm88 = vcmask 1043458
  %vm89 = vmor %vm88, %vm87
  %vm90 = vcmask 259076
  %vm91 = vmor %vm90, %vm89
  %92 = vst.msk [vmem:[#allocation2] sm:$0x3f] %vm91, %v85
  %v93 = vld [vmem:[#allocation2] sm:$0x3f]
  %95 = vrot.lane.b32.xlu0 %v93, 2
  %v96 = vpop.permute.xlu0 %95
  %v97 = vrot.slane %v96, 6
  %vm98 = vcmask 15360
  %v99 = vsel %vm98, %v97, %v96
  %v101 = vsub.f32 %v93, %v99
  %102 = vrot.lane.b32.xlu0 %v93, 32
  %v103 = vpop.permute.xlu0 %102
  %v104 = vrot.slane %v103, 6
  %v105 = vsel %vm84, %v104, %v103
  %v107 = vsub.f32 %v93, %v105
  %v108 = vmul.f32 %v101, 2.0
  %110 = vrot.lane.b32.xlu0 %v108, 112
  %v111 = vpop.permute.xlu0 %110
  %v112 = vrot.slane %v111, 2
  %vm113 = vcmask 916480
  %v114 = vsel %vm113, %v111, %v112
  %v116 = vadd.f32 %v101, %v114
  %118 = vrot.lane.b32.xlu0 %v101, 96
  %v119 = vpop.permute.xlu0 %118
  %v120 = vrot.slane %v119, 2
  %vm121 = vcmask 785408
  %v122 = vsel %vm121, %v119, %v120
  %v124 = vadd.f32 %v116, %v122
  %v125 = vmul.f32 %v107, 2.0
  %127 = vrot.lane.b32.xlu0 %v125, 127
  %v128 = vpop.permute.xlu0 %127
  %v129 = vrot.slane %v128, 2
  %vm130 = vcmask 1039360
  %v131 = vsel %vm130, %v128, %v129
  %v133 = vadd.f32 %v107, %v131
  %135 = vrot.lane.b32.xlu0 %v107, 126
  %v136 = vpop.permute.xlu0 %135
  %v137 = vrot.slane %v136, 2
  %vm138 = vcmask 1031168
  %v139 = vsel %vm138, %v136, %v137
  %v141 = vadd.f32 %v133, %v139
  %v142 = vmul.f32 %v124, %v124
  %v143 = vmul.f32 %v141, %v141
  %145 = vrot.lane.b32.xlu0 %v143, 98
  %v146 = vpop.permute.xlu0 %145
  %v147 = vrot.slane %v146, 2
  %vm148 = vcmask 801792
  %v149 = vsel %vm148, %v146, %v147
  %v151 = vadd.f32 %v142, %v149
  %153 = vrot.lane.b32.xlu0 %v151, 126
  %v154 = vpop.permute.xlu0 %153
  %v155 = vrot.slane %v154, 2
  %v156 = vsel %vm138, %v154, %v155
  %158 = vst [vmem:[%s1] sm:$0xf] %v156
  // Predicated region
  $region6: #{sobel_pallas.1} parent=0 // pred_check
    _
  $region7: #{sobel_pallas.1} parent=0 // pred_check_branch
    %160 = sbr.rel (0) target = $region9
  $region8: #{sobel_pallas.1} parent=0 // pred_region
    _
  $region9: #{sobel_pallas.1} parent=0 // pred_fallthru
    _
  // Predicated region
  $region10: #{sobel_pallas.1} parent=0 // pred_check
    _
  $region11: #{sobel_pallas.1} parent=0 // pred_check_branch
    %162 = sbr.rel (0) target = $region13
  $region12: #{sobel_pallas.1} parent=0 // pred_region
    _
  $region13: #{sobel_pallas.1} parent=0 // pred_fallthru
    _

</llo_original>
